<compile_context>
chip_gen: v6e
topology: v6e:2x2x1
jax: 0.10.0
libtpu: 0.0.40
codegen_flags: <defaults>
</compile_context>

<pallas_src>
import jax
import jax.numpy as jnp
from jax.experimental import pallas as pl
from jax.experimental.pallas import tpu as pltpu

# TODO(synk): Lambda is generic over an arbitrary Python callable `func`; only
# the softplus instantiation has a Pallas kernel here.

_LANE = 128
_MAX_BLOCK_BYTES = 2 * 1024 * 1024      # per-tile budget; conservative for v7x VMEM
_SMALL_FALLBACK_BYTES = 256 * 1024      # below this, fused XLA softplus is faster


def _cdiv(a: int, b: int) -> int:
    return -(-a // b)


def _sublane_multiple(dtype) -> int:
    """Second-to-last-dim rounding unit: 8 rows for 4B, 16 for 2B, 32 for 1B."""
    itemsize = jnp.dtype(dtype).itemsize
    return 8 * max(1, 4 // itemsize)


def _softplus_kernel(x_ref, o_ref):
    x = x_ref[...]
    # Cheap ops stay in the native dtype (bf16 VPU on v6e/v7x); only the
    # transcendentals are widened to f32 for accuracy.
    pos = jnp.maximum(x, 0).astype(jnp.float32)
    tail = jnp.log1p(jnp.exp(-jnp.abs(x).astype(jnp.float32)))
    o_ref[...] = (pos + tail).astype(o_ref.dtype)


def lambda_forward(x: jax.Array, *, force_pallas: bool = False) -> jax.Array:
    """Lambda(softplus).forward(x) with a Pallas TPU fast path."""
    if x.size == 0 or x.ndim == 0 or not jnp.issubdtype(x.dtype, jnp.floating):
        return jax.nn.softplus(x)

    itemsize = jnp.dtype(x.dtype).itemsize
    if not force_pallas and x.size * itemsize < _SMALL_FALLBACK_BYTES:
        # Tiny tensors: pallas_call fixed cost dominates; let XLA fuse it.
        return jax.nn.softplus(x)

    orig_shape = x.shape
    if x.ndim == 1:
        B, R, C = 1, 1, x.shape[0]
    else:
        R, C = x.shape[-2], x.shape[-1]
        B = x.size // (R * C)

    pack = _sublane_multiple(x.dtype)

    # Merge leading dims into the row dim when that keeps the (sublane, lane)
    # tiling intact (rows already a multiple of the physical sublane tile).
    if B > 1 and R % pack == 0:
        R, B = B * R, 1
    x3 = x.reshape(B, R, C)          # layout-preserving: last two dims unchanged

    # Last-dim block: full extent, unless it is a huge 128-multiple.
    if C % _LANE == 0 and C * itemsize * pack > _MAX_BLOCK_BYTES:
        block_c = max(_LANE, (_MAX_BLOCK_BYTES // (itemsize * pack)) // _LANE * _LANE)
    else:
        block_c = C

    # Row block: as many sublane-multiples as fit in the byte budget,
    # or the full extent when it already fits.
    rows_budget = max(pack, (_MAX_BLOCK_BYTES // (block_c * itemsize)) // pack * pack)
    block_r = R if R <= rows_budget else rows_budget

    # If the whole array fits in one block, split the rows in two so the
    # parallel grid axis can be sharded across v7x's two TensorCores
    # (costs only one extra ~0.35us step on single-core v5e/v6e).
    if B * _cdiv(R, block_r) * _cdiv(C, block_c) == 1 and R > pack:
        cand = _cdiv(_cdiv(R, 2), pack) * pack
        if cand < R:
            block_r = cand

    grid = (B, _cdiv(R, block_r), _cdiv(C, block_c))

    block_bytes = block_r * block_c * itemsize
    # 2 buffers x (in + out) plus 2x headroom, floored at 8 MiB.
    vmem_limit = int(min(100 << 20, max(8 << 20, 8 * block_bytes)))

    cost = pl.CostEstimate(
        flops=5 * x.size,
        transcendentals=2 * x.size,
        bytes_accessed=2 * x.size * itemsize,
    )

    out3 = pl.pallas_call(
        _softplus_kernel,
        out_shape=jax.ShapeDtypeStruct((B, R, C), x.dtype),
        grid=grid,
        in_specs=[pl.BlockSpec((pl.Squeezed(), block_r, block_c),
                               lambda b, i, j: (b, i, j))],
        out_specs=pl.BlockSpec((pl.Squeezed(), block_r, block_c),
                               lambda b, i, j: (b, i, j)),
        compiler_params=pltpu.CompilerParams(
            dimension_semantics=("parallel", "parallel", "parallel"),
            vmem_limit_bytes=vmem_limit,
        ),
        cost_estimate=cost,
    )(x3)

    return out3.reshape(orig_shape)


if __name__ == "__main__":
    k0, k1 = jax.random.split(jax.random.PRNGKey(0))

    # NCHW input like the PyTorch module would see: batch=2, channels=4, 16x16.
    x = jax.random.normal(k0, (2, 4, 16, 16), dtype=jnp.float32)
    y = jax.block_until_ready(lambda_forward(x, force_pallas=True))
    y_ref = jax.nn.softplus(x)
    assert y.shape == x.shape and y.dtype == x.dtype
    assert jnp.allclose(y, y_ref, atol=1e-5, rtol=1e-5)

    # Second check: bf16 with rows not a multiple of the sublane tile, so the
    # Squeezed-leading-dim grid path (no merge, full-extent trailing block)
    # is exercised as well.
    xb = jax.random.normal(k1, (3, 2, 20, 48), dtype=jnp.bfloat16)
    yb = jax.block_until_ready(lambda_forward(xb, force_pallas=True))
    yb_ref = jax.nn.softplus(xb)
    assert yb.shape == xb.shape and yb.dtype == xb.dtype
    assert jnp.allclose(yb.astype(jnp.float32), yb_ref.astype(jnp.float32),
                        atol=2e-2, rtol=2e-2)

    print("KERNEL_OK")
</pallas_src>

<mosaic_0001>
module attributes {stable_mosaic.version = 11 : i64} {
  func.func @_softplus_kernel(%arg0: i32, %arg1: i32, %arg2: i32, %arg3: memref<1x64x16xf32, #tpu.memory_space<vmem>>, %arg4: memref<1x64x16xf32, #tpu.memory_space<vmem>>) attributes {dimension_semantics = [#tpu.dimension_semantics<parallel>, #tpu.dimension_semantics<parallel>, #tpu.dimension_semantics<parallel>], iteration_bounds = array<i64: 1, 2, 1>, scalar_prefetch = 0 : i64, scratch_operands = 0 : i64, tpu.core_type = #tpu.core_type<tc>, window_params = [{transform_indices = @transform_0, window_bounds = array<i64: 1, 64, 16>}, {transform_indices = @transform_1, window_bounds = array<i64: 1, 64, 16>}]} {
    %c0 = arith.constant 0 : index
    %c0_0 = arith.constant 0 : index
    %c0_1 = arith.constant 0 : index
    %0 = vector.load %arg3[%c0, %c0_0, %c0_1] : memref<1x64x16xf32, #tpu.memory_space<vmem>>, vector<1x64x16xf32>
    %1 = vector.shape_cast %0 : vector<1x64x16xf32> to vector<64x16xf32>
    %cst = arith.constant 0.000000e+00 : f32
    %2 = vector.broadcast %cst : f32 to vector<64x16xf32>
    %3 = arith.maximumf %1, %2 : vector<64x16xf32>
    %4 = math.absf %1 : vector<64x16xf32>
    %cst_2 = arith.constant 0.000000e+00 : f32
    %5 = vector.broadcast %cst_2 : f32 to vector<64x16xf32>
    %6 = arith.subf %5, %4 : vector<64x16xf32>
    %7 = math.exp %6 : vector<64x16xf32>
    %8 = math.log1p %7 : vector<64x16xf32>
    %9 = arith.addf %3, %8 : vector<64x16xf32>
    %c0_3 = arith.constant 0 : index
    %c0_4 = arith.constant 0 : index
    %c0_5 = arith.constant 0 : index
    %10 = vector.load %arg4[%c0_3, %c0_4, %c0_5] : memref<1x64x16xf32, #tpu.memory_space<vmem>>, vector<1x64x16xf32>
    %11 = vector.shape_cast %10 : vector<1x64x16xf32> to vector<64x16xf32>
    %12 = vector.shape_cast %9 : vector<64x16xf32> to vector<1x64x16xf32>
    tpu.vector_store %arg4[%c0_3, %c0_4, %c0_5], %12 {strides = array<i32>} : memref<1x64x16xf32, #tpu.memory_space<vmem>>, vector<1x64x16xf32>,
    return
  }
  func.func @transform_0(%arg0: i32, %arg1: i32, %arg2: i32) -> (i32, i32, i32) {
    %c0_i32 = arith.constant 0 : i32
    return %arg0, %arg1, %arg2 : i32, i32, i32
  }
  func.func @transform_1(%arg0: i32, %arg1: i32, %arg2: i32) -> (i32, i32, i32) {
    %c0_i32 = arith.constant 0 : i32
    return %arg0, %arg1, %arg2 : i32, i32, i32
  }
}

</mosaic_0001>

<llo_original>
// kernel: tpu_custom_call.1
$region0: #{tpu_custom_call.1}
  #allocation0 [shape = 'u32[]', space=smem, size = 0x4, offset = 0x4, fixed_abs, tag = 'smem constant byte address 0x4 - core index']
  #allocation1 [shape = 'u32[144,128]{1,0:T(1,128)}', space=vmem, size = 0x12000, scoped, tag = 'internal scratch']
  %s0 = inlined_call_operand.vmem [shape: f32[1,128,16], index: 0, kind: input, shape index: {}]
  %s1 = inlined_call_operand.vmem [shape: f32[1,128,16], index: 1, kind: output, shape index: {}]
  %s2 = sld [smem:[#allocation0]]
  $region37: #{tpu_custom_call.1} parent=0
    _
  %s4 = ssub.s32 1, %s2
  %s5 = scalar_select 0, %s4, %s2
  loop: start=0, step=1, limit=4
  $region2: #{tpu_custom_call.1} parent=0 // loop_pre_header
    _
  $region3: #{tpu_custom_call.1} parent=0 // loop_header
    %s7 = sphi 0, %s11
    %p8 = scmp.ge.s32.totalorder %s7, 4
    %s14 = sphi 0, %s33
    %s15 = sphi 0, %s29
    %s16 = sphi 0, %s25
    %s17 = sphi 0, %s14
    %s18 = sphi 0, %s15
    %s19 = sphi 0, %s16
    %s20 = sphi 0, %s17
    %s21 = sphi 0, %s18
    %s22 = sphi 0, %s19
    %s40 = sphi 0, %s42
    %s43 = sphi 0, %s40
    %s44 = sphi 0, %s43
    %s60 = sphi 0, %s44
    %s70 = sphi 0, %s72
    %s73 = sphi 0, %s70
    %s74 = sphi 0, %s73
    %s90 = sphi 0, %s74
  $region4: #{tpu_custom_call.1} parent=0 // loop_header_branch
    %10 = sbr.rel (%p8) target = $region8
  $region5: #{tpu_custom_call.1} parent=0 // loop_body
    %s12 = ssub.s32 %s7, 1
    %s13 = ssub.s32 %s7, 2
    %s23 = sadd.s32 1, %s16
    %p24 = scmp.ge.s32.totalorder %s23, 1
    %s25 = scalar_select %p24, 0, %s23
    %s26 = sadd.s32 1, %s15
    %s27 = scalar_select %p24, %s26, %s15
    %p28 = scmp.ge.s32.totalorder %s27, 2
    %s29 = scalar_select %p28, 0, %s27
    %s30 = sadd.s32 1, %s14
    %s31 = scalar_select %p28, %s30, %s14
    %p32 = scmp.ge.s32.totalorder %s31, 1
    %s33 = scalar_select %p32, 0, %s31
    %s34 = ssub.s32 %s14, %s33
    %s35 = ssub.s32 %s15, %s29
    %s36 = sor.u32 %s34, %s35
    %s37 = ssub.s32 %s16, %s25
    %s38 = sor.u32 %s36, %s37
    %p39 = scmp.eq.s32.totalorder %s38, 0
    %s41 = sadd.s32 %s40, 1
    %s42 = scalar_select %p39, %s40, %s41
    %p45 = pneg %p39
    %p46 = scmp.eq.s32.totalorder %s7, 1
    %p47 = por %p45, %p46
    %p48 = scmp.ne.s32.totalorder %s40, %s43
    %p49 = scmp.eq.s32.totalorder %s7, 0
    %p50 = por %p48, %p49
    %p51 = scmp.ne.s32.totalorder %s40, %s43
    %p52 = scmp.eq.s32.totalorder %s12, 1
    %p53 = por %p51, %p52
    %p54 = scmp.ne.s32.totalorder %s43, %s44
    %p55 = scmp.eq.s32.totalorder %s12, 0
    %p56 = por %p54, %p55
    %p57 = scmp.ne.s32.totalorder %s43, %s44
    %p58 = scmp.eq.s32.totalorder %s13, 1
    %p59 = por %p57, %p58
    %p61 = scmp.ne.s32.totalorder %s44, %s60
    %p62 = scmp.eq.s32.totalorder %s13, 0
    %p63 = por %p61, %p62
    %s64 = ssub.s32 %s14, %s33
    %s65 = ssub.s32 %s15, %s29
    %s66 = sor.u32 %s64, %s65
    %s67 = ssub.s32 %s16, %s25
    %s68 = sor.u32 %s66, %s67
    %p69 = scmp.eq.s32.totalorder %s68, 0
    %s71 = sadd.s32 %s70, 1
    %s72 = scalar_select %p69, %s70, %s71
    %p75 = pneg %p69
    %p76 = scmp.eq.s32.totalorder %s7, 1
    %p77 = por %p75, %p76
    %p78 = scmp.ne.s32.totalorder %s70, %s73
    %p79 = scmp.eq.s32.totalorder %s7, 0
    %p80 = por %p78, %p79
    %p81 = scmp.ne.s32.totalorder %s70, %s73
    %p82 = scmp.eq.s32.totalorder %s12, 1
    %p83 = por %p81, %p82
    %p84 = scmp.ne.s32.totalorder %s73, %s74
    %p85 = scmp.eq.s32.totalorder %s12, 0
    %p86 = por %p84, %p85
    %p87 = scmp.ne.s32.totalorder %s73, %s74
    %p88 = scmp.eq.s32.totalorder %s13, 1
    %p89 = por %p87, %p88
    %p91 = scmp.ne.s32.totalorder %s74, %s90
    %p92 = scmp.eq.s32.totalorder %s13, 0
    %p93 = por %p91, %p92
    %p94 = scmp.le.s32.totalorder 1, %s7
    %p95 = scmp.lt.s32.totalorder %s7, 3
    %p96 = pnand %p94, %p95
    %p97 = pneg %p96
    // Predicated region
    $region9: #{tpu_custom_call.1} parent=5 // pred_check
      _
    $region10: #{tpu_custom_call.1} parent=5 // pred_check_branch
      %99 = sbr.rel (%p96) target = $region12
    $region11: #{tpu_custom_call.1} parent=5 // pred_region
      %s100 = ssub.s32 %s7, 1
    $region12: #{tpu_custom_call.1} parent=5 // pred_fallthru
      _
    %p101 = scmp.lt.s32.totalorder %s7, 2
    // Predicated region
    $region13: #{tpu_custom_call.1} parent=5 // pred_check
      %p102 = pneg %p101
    $region14: #{tpu_custom_call.1} parent=5 // pred_check_branch
      %104 = sbr.rel (%p102) target = $region16
    $region15: #{tpu_custom_call.1} parent=5 // pred_region
      // Predicated region
      $region17: #{tpu_custom_call.1} parent=15 // pred_check
        %p105 = pneg %p50
      $region18: #{tpu_custom_call.1} parent=15 // pred_check_branch
        %107 = sbr.rel (%p105) target = $region20
      $region19: #{tpu_custom_call.1} parent=15 // pred_region
        %s108 = smul.u32 8, %s15
        %p109 = scmp.lt.s32.totalorder %s14, 0
        %s110 = scalar_select %p109, %s14, 0
        %p111 = scmp.lt.s32.totalorder %s108, 15
        %s112 = scalar_select %p111, %s108, 15
        %p113 = scmp.lt.s32.totalorder %s16, 0
        %s114 = scalar_select %p113, %s16, 0
        %s115 = sadd.s32 %s114, %s112
        %s116 = smul.addr %s110, 16
        %s117 = sadd.s32 %s115, %s116
        %s118 = smul.addr %s117, 8
        %s119 = scalar_lea.vmem %s0, %s118
        %s120 = smul.u32 8, %s15
      $region20: #{tpu_custom_call.1} parent=15 // pred_fallthru
        _
    $region16: #{tpu_custom_call.1} parent=5 // pred_fallthru
      _
    %p121 = scmp.le.s32.totalorder 1, %s7
    %p122 = scmp.lt.s32.totalorder %s7, 3
    %p123 = pnand %p121, %p122
    %p124 = pneg %p123
    // Predicated region
    $region21: #{tpu_custom_call.1} parent=5 // pred_check
      _
    $region22: #{tpu_custom_call.1} parent=5 // pred_check_branch
      %126 = sbr.rel (%p123) target = $region24
    $region23: #{tpu_custom_call.1} parent=5 // pred_region
      %s127 = ssub.s32 %s7, 1
      %s128 = smul.u32 8, %s18
      %p129 = scmp.lt.s32.totalorder %s17, 0
      %s130 = scalar_select %p129, %s17, 0
      %p131 = scmp.lt.s32.totalorder %s128, 15
      %s132 = scalar_select %p131, %s128, 15
      %p133 = scmp.lt.s32.totalorder %s19, 0
      %s134 = scalar_select %p133, %s19, 0
      %s135 = sadd.s32 %s134, %s132
      %s136 = smul.addr %s130, 16
      %s137 = sadd.s32 %s135, %s136
      %s138 = smul.addr %s137, 8
      %s139 = scalar_lea.vmem %s0, %s138
      %p140 = pneg %p56
      %p141 = pneg %p53
      %p142 = pneg %p86
      %p143 = pneg %p83
      %s144 = smul.u32 8, %s18
      %p145 = scmp.lt.s32.totalorder %s17, 0
      %s146 = scalar_select %p145, %s17, 0
      %p147 = scmp.lt.s32.totalorder %s144, 15
      %s148 = scalar_select %p147, %s144, 15
      %p149 = scmp.lt.s32.totalorder %s19, 0
      %s150 = scalar_select %p149, %s19, 0
      %s151 = sadd.s32 %s150, %s148
      %s152 = smul.addr %s146, 16
      %s153 = sadd.s32 %s151, %s152
      %s154 = smul.addr %s153, 8
      %s155 = scalar_lea.vmem %s1, %s154
      %s156 = smul.u32 8, %s18
      %p157 = scmp.lt.s32.totalorder %s17, 0
      %s158 = scalar_select %p157, %s17, 0
      %p159 = scmp.lt.s32.totalorder %s156, 15
      %s160 = scalar_select %p159, %s156, 15
      %p161 = scmp.lt.s32.totalorder %s19, 0
      %s162 = scalar_select %p161, %s19, 0
      %s163 = sadd.s32 %s162, %s160
      %s164 = smul.addr %s158, 16
      %s165 = sadd.s32 %s163, %s164
      %s166 = smul.addr %s165, 8
      %s167 = scalar_lea.vmem %s0, %s166
      %s168 = smul.u32 8, %s18
      %s169 = smul.u32 8, %s18
      %p170 = scmp.lt.s32.totalorder %s17, 0
      %s171 = scalar_select %p170, %s17, 0
      %p172 = scmp.lt.s32.totalorder %s169, 15
      %s173 = scalar_select %p172, %s169, 15
      %p174 = scmp.lt.s32.totalorder %s19, 0
      %s175 = scalar_select %p174, %s19, 0
      %s176 = sadd.s32 %s175, %s173
      %s177 = smul.addr %s171, 16
      %s178 = sadd.s32 %s176, %s177
      %s179 = smul.addr %s178, 8
      %s180 = scalar_lea.vmem %s1, %s179
      %s181 = smul.u32 8, %s18
      %v182 = vld [vmem:[%s167] sm:$0xff]
      %v183 = vld [vmem:[%s167 + $0x8] sm:$0xff]
      %v184 = vld [vmem:[%s167 + $0x10] sm:$0xff]
      %v185 = vld [vmem:[%s167 + $0x18] sm:$0xff]
      %v186 = vld [vmem:[%s167 + $0x20] sm:$0xff]
      %v187 = vld [vmem:[%s167 + $0x28] sm:$0xff]
      %v188 = vld [vmem:[%s167 + $0x30] sm:$0xff]
      %v189 = vld [vmem:[%s167 + $0x38] sm:$0xff]
      %v190 = vmax.f32 %v182, 0.0
      %v191 = vmax.f32 %v183, 0.0
      %v192 = vmax.f32 %v184, 0.0
      %v193 = vmax.f32 %v185, 0.0
      %v194 = vmax.f32 %v186, 0.0
      %v195 = vmax.f32 %v187, 0.0
      %v196 = vmax.f32 %v188, 0.0
      %v197 = vmax.f32 %v189, 0.0
      %v198 = vand.u32 2147483647, %v182
      %v199 = vand.u32 2147483647, %v183
      %v200 = vand.u32 2147483647, %v184
      %v201 = vand.u32 2147483647, %v185
      %v202 = vand.u32 2147483647, %v186
      %v203 = vand.u32 2147483647, %v187
      %v204 = vand.u32 2147483647, %v188
      %v205 = vand.u32 2147483647, %v189
      %v206 = vsub.f32 0.0, %v198
      %v207 = vsub.f32 0.0, %v199
      %v208 = vsub.f32 0.0, %v200
      %v209 = vsub.f32 0.0, %v201
      %v210 = vsub.f32 0.0, %v202
      %v211 = vsub.f32 0.0, %v203
      %v212 = vsub.f32 0.0, %v204
      %v213 = vsub.f32 0.0, %v205
      %v214 = vmul.f32 %v206, 1.442695
      %v215 = vpow.pop %v214
      %v216 = vmul.f32 %v207, 1.442695
      %v217 = vpow.pop %v216
      %v218 = vmul.f32 %v208, 1.442695
      %v219 = vpow.pop %v218
      %v220 = vmul.f32 %v209, 1.442695
      %v221 = vpow.pop %v220
      %v222 = vmul.f32 %v210, 1.442695
      %v223 = vpow.pop %v222
      %v224 = vmul.f32 %v211, 1.442695
      %v225 = vpow.pop %v224
      %v226 = vmul.f32 %v212, 1.442695
      %v227 = vpow.pop %v226
      %v228 = vmul.f32 %v213, 1.442695
      %v229 = vpow.pop %v228
      %v230 = vadd.f32 %v215, 1.0
      %v231 = vlog2.pop %v230
      %v232 = vmul.f32 %v231, 0.6931472
      %v233 = vmul.f32 -0.5, %v215
      %v234 = vadd.f32 %v233, 1.0
      %v235 = vmul.f32 %v234, %v215
      %v236 = vand.u32 2147483647, %v215
      %vm237 = vcmp.lt.f32.partialorder %v236, 0.0004427343
      %v238 = vsel %vm237, %v235, %v232
      %v239 = vadd.f32 %v217, 1.0
      %v240 = vlog2.pop %v239
      %v241 = vmul.f32 %v240, 0.6931472
      %v242 = vmul.f32 -0.5, %v217
      %v243 = vadd.f32 %v242, 1.0
      %v244 = vmul.f32 %v243, %v217
      %v245 = vand.u32 2147483647, %v217
      %vm246 = vcmp.lt.f32.partialorder %v245, 0.0004427343
      %v247 = vsel %vm246, %v244, %v241
      %v248 = vadd.f32 %v219, 1.0
      %v249 = vlog2.pop %v248
      %v250 = vmul.f32 %v249, 0.6931472
      %v251 = vmul.f32 -0.5, %v219
      %v252 = vadd.f32 %v251, 1.0
      %v253 = vmul.f32 %v252, %v219
      %v254 = vand.u32 2147483647, %v219
      %vm255 = vcmp.lt.f32.partialorder %v254, 0.0004427343
      %v256 = vsel %vm255, %v253, %v250
      %v257 = vadd.f32 %v221, 1.0
      %v258 = vlog2.pop %v257
      %v259 = vmul.f32 %v258, 0.6931472
      %v260 = vmul.f32 -0.5, %v221
      %v261 = vadd.f32 %v260, 1.0
      %v262 = vmul.f32 %v261, %v221
      %v263 = vand.u32 2147483647, %v221
      %vm264 = vcmp.lt.f32.partialorder %v263, 0.0004427343
      %v265 = vsel %vm264, %v262, %v259
      %v266 = vadd.f32 %v223, 1.0
      %v267 = vlog2.pop %v266
      %v268 = vmul.f32 %v267, 0.6931472
      %v269 = vmul.f32 -0.5, %v223
      %v270 = vadd.f32 %v269, 1.0
      %v271 = vmul.f32 %v270, %v223
      %v272 = vand.u32 2147483647, %v223
      %vm273 = vcmp.lt.f32.partialorder %v272, 0.0004427343
      %v274 = vsel %vm273, %v271, %v268
      %v275 = vadd.f32 %v225, 1.0
      %v276 = vlog2.pop %v275
      %v277 = vmul.f32 %v276, 0.6931472
      %v278 = vmul.f32 -0.5, %v225
      %v279 = vadd.f32 %v278, 1.0
      %v280 = vmul.f32 %v279, %v225
      %v281 = vand.u32 2147483647, %v225
      %vm282 = vcmp.lt.f32.partialorder %v281, 0.0004427343
      %v283 = vsel %vm282, %v280, %v277
      %v284 = vadd.f32 %v227, 1.0
      %v285 = vlog2.pop %v284
      %v286 = vmul.f32 %v285, 0.6931472
      %v287 = vmul.f32 -0.5, %v227
      %v288 = vadd.f32 %v287, 1.0
      %v289 = vmul.f32 %v288, %v227
      %v290 = vand.u32 2147483647, %v227
      %vm291 = vcmp.lt.f32.partialorder %v290, 0.0004427343
      %v292 = vsel %vm291, %v289, %v286
      %v293 = vadd.f32 %v229, 1.0
      %v294 = vlog2.pop %v293
      %v295 = vmul.f32 %v294, 0.6931472
      %v296 = vmul.f32 -0.5, %v229
      %v297 = vadd.f32 %v296, 1.0
      %v298 = vmul.f32 %v297, %v229
      %v299 = vand.u32 2147483647, %v229
      %vm300 = vcmp.lt.f32.partialorder %v299, 0.0004427343
      %v301 = vsel %vm300, %v298, %v295
      %v302 = vadd.f32 %v190, %v238
      %v303 = vadd.f32 %v191, %v247
      %v304 = vadd.f32 %v192, %v256
      %v305 = vadd.f32 %v193, %v265
      %v306 = vadd.f32 %v194, %v274
      %v307 = vadd.f32 %v195, %v283
      %v308 = vadd.f32 %v196, %v292
      %v309 = vadd.f32 %v197, %v301
      %vm310 = vcmask 130048
      %311 = vst.msk [vmem:[%s180] sm:$0xff] %vm310, %v302
      %312 = vst.msk [vmem:[%s180 + $0x8] sm:$0xff] %vm310, %v303
      %313 = vst.msk [vmem:[%s180 + $0x10] sm:$0xff] %vm310, %v304
      %314 = vst.msk [vmem:[%s180 + $0x18] sm:$0xff] %vm310, %v305
      %315 = vst.msk [vmem:[%s180 + $0x20] sm:$0xff] %vm310, %v306
      %316 = vst.msk [vmem:[%s180 + $0x28] sm:$0xff] %vm310, %v307
      %317 = vst.msk [vmem:[%s180 + $0x30] sm:$0xff] %vm310, %v308
      %318 = vst.msk [vmem:[%s180 + $0x38] sm:$0xff] %vm310, %v309
      %s319 = smul.u32 8, %s18
      %p320 = scmp.lt.s32.totalorder %s17, 0
      %s321 = scalar_select %p320, %s17, 0
      %p322 = scmp.lt.s32.totalorder %s319, 15
      %s323 = scalar_select %p322, %s319, 15
      %p324 = scmp.lt.s32.totalorder %s19, 0
      %s325 = scalar_select %p324, %s19, 0
      %s326 = sadd.s32 %s325, %s323
      %s327 = smul.addr %s321, 16
      %s328 = sadd.s32 %s326, %s327
      %s329 = smul.addr %s328, 8
      %s330 = scalar_lea.vmem %s1, %s329
      // Predicated region
      $region25: #{tpu_custom_call.1} parent=23 // pred_check
        %p331 = pneg %p83
      $region26: #{tpu_custom_call.1} parent=23 // pred_check_branch
        %333 = sbr.rel (%p331) target = $region28
      $region27: #{tpu_custom_call.1} parent=23 // pred_region
        %s334 = smul.u32 8, %s18
      $region28: #{tpu_custom_call.1} parent=23 // pred_fallthru
        _
    $region24: #{tpu_custom_call.1} parent=5 // pred_fallthru
      _
    %p335 = scmp.le.s32.totalorder 2, %s7
    // Predicated region
    $region29: #{tpu_custom_call.1} parent=5 // pred_check
      %p336 = pneg %p335
    $region30: #{tpu_custom_call.1} parent=5 // pred_check_branch
      %338 = sbr.rel (%p336) target = $region32
    $region31: #{tpu_custom_call.1} parent=5 // pred_region
      %s339 = ssub.s32 %s7, 2
      // Predicated region
      $region33: #{tpu_custom_call.1} parent=31 // pred_check
        %p340 = pneg %p89
      $region34: #{tpu_custom_call.1} parent=31 // pred_check_branch
        %342 = sbr.rel (%p340) target = $region36
      $region35: #{tpu_custom_call.1} parent=31 // pred_region
        %s343 = smul.u32 8, %s21
        %p344 = scmp.lt.s32.totalorder %s20, 0
        %s345 = scalar_select %p344, %s20, 0
        %p346 = scmp.lt.s32.totalorder %s343, 15
        %s347 = scalar_select %p346, %s343, 15
        %p348 = scmp.lt.s32.totalorder %s22, 0
        %s349 = scalar_select %p348, %s22, 0
        %s350 = sadd.s32 %s349, %s347
        %s351 = smul.addr %s345, 16
        %s352 = sadd.s32 %s350, %s351
        %s353 = smul.addr %s352, 8
        %s354 = scalar_lea.vmem %s1, %s353
      $region36: #{tpu_custom_call.1} parent=31 // pred_fallthru
        _
    $region32: #{tpu_custom_call.1} parent=5 // pred_fallthru
      _
  $region6: #{tpu_custom_call.1} parent=0 // loop_footer
    %s11 = sadd.s32 1, %s7
  $region7: #{tpu_custom_call.1} parent=0 // loop_footer_branch
    %6 = sbr.rel target = $region3
  $region8: #{tpu_custom_call.1} parent=0 // loop_exit
    _

</llo_original>
